<compile_context>
chip_gen: v7x
topology: tpu7x:2x2x1
jax: 0.10.0
libtpu: 0.0.40
codegen_flags: <defaults>
</compile_context>

<pallas_src>
import math

import jax
import jax.numpy as jnp
from jax.experimental import pallas as pl
from jax.experimental.pallas import tpu as pltpu


def _round_up(x, m):
    return (x + m - 1) // m * m


def _cdiv(a, b):
    return -(-a // b)


def _pick_tiling(b_total, tile_bags):
    """Choose (bags per tile, number of tiles).

    Tiles are multiples of 8 bags (sublane alignment of tB*25 rows), capped at
    192 bags so the resident pool matrix + double-buffered inputs stay far
    below the 32 MiB scoped VMEM limit (v7x only has 64 MiB physical VMEM).
    Whenever b_total allows, use >= 2 tiles so both v7x TensorCores get work.
    """
    cap = max(8, (min(tile_bags, 192) // 8) * 8)
    if b_total <= 8:
        return 8, 1
    n_tiles = max(2, _cdiv(b_total, cap))
    tb = min(cap, _round_up(_cdiv(b_total, n_tiles), 8))
    n_tiles = _cdiv(b_total, tb)
    return tb, n_tiles


def _cnp_fused_kernel(t_ref, g_ref, pool_ref, w1t_ref, w1g_ref, b1_ref,
                      wd_ref, bd_ref, dw2_ref, db2_ref, out_ref):
    # Fused touch+gaze first encoder layer (block-diagonal weights expressed
    # as a sum of two matmuls): (rows, 4) & (rows, 5) -> (rows, 64).
    h1 = jnp.dot(t_ref[...], w1t_ref[...], preferred_element_type=jnp.float32)
    h1 = h1 + jnp.dot(g_ref[...], w1g_ref[...],
                      preferred_element_type=jnp.float32)
    h1 = jnp.maximum(h1 + b1_ref[...], 0.0)

    # Segment mean over the 25 contiguous instance rows of each bag, using the
    # VMEM-resident pooling matrix (constant index_map -> DMA'd once).
    p = jnp.dot(pool_ref[...], h1, preferred_element_type=jnp.float32)  # (tB, 64)

    # Second encoder layer folded with the first decoder layer in the wrapper
    # (W = w2 @ dw1, b = b2 @ dw1 + db1): (tB, 64) -> (tB, 32) + ReLU.
    h2 = jnp.maximum(
        jnp.dot(p, wd_ref[...], preferred_element_type=jnp.float32) + bd_ref[...],
        0.0)

    # Final 1-column layer as a VPU multiply + lane reduction (no 1-col MXU).
    logit = jnp.sum(h2 * dw2_ref[...], axis=-1, keepdims=True) + db2_ref[...]
    out_ref[...] = jax.nn.sigmoid(logit)                                # (tB, 1)


def init_params(key, num_inst_pts=25, latent_dim=32, touch_inp=4, gaze_inp=5):
    """Deterministic PyTorch-style (uniform +-1/sqrt(fan_in)) Linear init."""
    decoder_input = 2 * latent_dim

    def linear(key, fan_in, fan_out):
        k = 1.0 / math.sqrt(fan_in)
        kw, kb = jax.random.split(key)
        w = jax.random.uniform(kw, (fan_in, fan_out), jnp.float32, -k, k)
        b = jax.random.uniform(kb, (1, fan_out), jnp.float32, -k, k)
        return w, b

    keys = jax.random.split(key, 6)
    tw1, tb1 = linear(keys[0], touch_inp, latent_dim)
    tw2, tb2 = linear(keys[1], latent_dim, latent_dim)
    gw1, gb1 = linear(keys[2], gaze_inp, latent_dim)
    gw2, gb2 = linear(keys[3], latent_dim, latent_dim)
    dw1, db1 = linear(keys[4], decoder_input, latent_dim)
    dw2, db2 = linear(keys[5], latent_dim, 1)
    return dict(tw1=tw1, tb1=tb1, tw2=tw2, tb2=tb2,
                gw1=gw1, gb1=gb1, gw2=gw2, gb2=gb2,
                dw1=dw1, db1=db1, dw2=dw2, db2=db2)


def asd_td_cnp_forward(params, touch_d_asd, gaze_d_asd, touch_d_td, gaze_d_td,
                       num_inst_pts=25, tile_bags=192):
    f32 = jnp.float32
    bs, num_ts_asd, touch_dim = touch_d_asd.shape
    _, _, gaze_dim = gaze_d_asd.shape
    _, num_ts_td, _ = touch_d_td.shape

    n_asd = bs * num_ts_asd
    n_td = bs * num_ts_td
    assert n_asd % num_inst_pts == 0, "bs*num_ts_asd must be a multiple of 25"
    assert n_td % num_inst_pts == 0, "bs*num_ts_td must be a multiple of 25"
    b_asd = n_asd // num_inst_pts
    b_td = n_td // num_inst_pts
    b_total = b_asd + b_td
    n_total = n_asd + n_td
    latent = params["tw2"].shape[0]              # 32

    tB, num_tiles = _pick_tiling(b_total, tile_bags)
    b_pad = num_tiles * tB
    rows_per_tile = tB * num_inst_pts
    rows_pad = b_pad * num_inst_pts

    # One concatenate per modality (ASD rows | TD rows | zero pad) -- this is
    # the only HBM copy of the activations before the kernel.
    def stack(a_asd, a_td, dim):
        parts = [a_asd.reshape(n_asd, dim).astype(f32),
                 a_td.reshape(n_td, dim).astype(f32)]
        if rows_pad > n_total:
            parts.append(jnp.zeros((rows_pad - n_total, dim), f32))
        return jnp.concatenate(parts, axis=0)

    touch = stack(touch_d_asd, touch_d_td, touch_dim)      # (rows_pad, 4)
    gaze = stack(gaze_d_asd, gaze_d_td, gaze_dim)          # (rows_pad, 5)

    # --- trace-time weight packing / algebraic folding (tiny, done once) ---
    # First encoder layer: block-diagonal split into two zero-padded halves.
    w1t = jnp.concatenate(
        [params["tw1"].astype(f32), jnp.zeros((touch_dim, latent), f32)], axis=1)
    w1g = jnp.concatenate(
        [jnp.zeros((gaze_dim, latent), f32), params["gw1"].astype(f32)], axis=1)
    b1 = jnp.concatenate([params["tb1"], params["gb1"]], axis=-1).astype(f32)

    # Second encoder layer (block-diagonal) folded into the first decoder layer:
    # rep @ dw1 + db1 = (pool@h1) @ (w2@dw1) + (b2@dw1 + db1).
    w2 = jnp.zeros((2 * latent, 2 * latent), f32)
    w2 = w2.at[:latent, :latent].set(params["tw2"])
    w2 = w2.at[latent:, latent:].set(params["gw2"])
    b2 = jnp.concatenate([params["tb2"], params["gb2"]], axis=-1)
    wd = (w2 @ params["dw1"]).astype(f32)                               # (64, 32)
    bd = (b2 @ params["dw1"] + params["db1"]).astype(f32)               # (1, 32)
    dw2_row = params["dw2"].T.astype(f32)                               # (1, 32)
    db2 = params["db2"].astype(f32)                                     # (1, 1)

    # Mean-pooling matrix for one tile (bags x instance rows). Built once here
    # and kept VMEM-resident in the kernel via a constant index_map -- no
    # per-tile iota/where work on the VPU.
    bag = jax.lax.broadcasted_iota(jnp.int32, (tB, rows_per_tile), 0)
    row = jax.lax.broadcasted_iota(jnp.int32, (tB, rows_per_tile), 1)
    lo = bag * num_inst_pts
    pool = jnp.where((row >= lo) & (row < lo + num_inst_pts),
                     f32(1.0 / num_inst_pts), f32(0.0))

    consts = (pool, w1t, w1g, b1, wd, bd, dw2_row, db2)

    out = pl.pallas_call(
        _cnp_fused_kernel,
        out_shape=jax.ShapeDtypeStruct((b_pad, 1), f32),
        grid=(num_tiles,),
        in_specs=[pl.BlockSpec((rows_per_tile, touch_dim), lambda i: (i, 0)),
                  pl.BlockSpec((rows_per_tile, gaze_dim), lambda i: (i, 0))]
                + [pl.BlockSpec(c.shape, lambda i: (0, 0)) for c in consts],
        out_specs=pl.BlockSpec((tB, 1), lambda i: (i, 0)),
        compiler_params=pltpu.CompilerParams(
            dimension_semantics=("parallel",),
            vmem_limit_bytes=32 * 1024 * 1024),
    )(touch, gaze, *consts)

    preds = out[:b_total]
    return preds[:b_asd], preds[b_asd:]


def _reference_forward(params, touch_d_asd, gaze_d_asd, touch_d_td, gaze_d_td,
                       num_inst_pts=25):
    """Pure-JAX reference mirroring the PyTorch forward."""
    def enc(x, w1, b1, w2, b2):
        return jnp.maximum(x @ w1 + b1, 0.0) @ w2 + b2

    def branch(touch, gaze):
        bs, nt, td = touch.shape
        gd = gaze.shape[-1]
        t = enc(touch.reshape(bs * nt, td), params["tw1"], params["tb1"],
                params["tw2"], params["tb2"])
        g = enc(gaze.reshape(bs * nt, gd), params["gw1"], params["gb1"],
                params["gw2"], params["gb2"])
        t = t.reshape(-1, num_inst_pts, t.shape[-1]).mean(axis=1)
        g = g.reshape(-1, num_inst_pts, g.shape[-1]).mean(axis=1)
        rep = jnp.concatenate([t, g], axis=-1)
        h = jnp.maximum(rep @ params["dw1"] + params["db1"], 0.0)
        return jax.nn.sigmoid(h @ params["dw2"] + params["db2"])

    return branch(touch_d_asd, gaze_d_asd), branch(touch_d_td, gaze_d_td)


if __name__ == "__main__":
    key = jax.random.PRNGKey(0)
    kp, k1, k2, k3, k4 = jax.random.split(key, 5)
    params = init_params(kp)

    # Case 1: small shapes, single grid tile.
    bs, num_ts = 2, 25          # num_ts must be a multiple of num_inst_pts (25)
    touch_d_asd = jax.random.normal(k1, (bs, num_ts, 4), jnp.float32)
    gaze_d_asd = jax.random.normal(k2, (bs, num_ts, 5), jnp.float32)
    touch_d_td = jax.random.normal(k3, (bs, num_ts, 4), jnp.float32)
    gaze_d_td = jax.random.normal(k4, (bs, num_ts, 5), jnp.float32)

    pred_asd, pred_td = asd_td_cnp_forward(
        params, touch_d_asd, gaze_d_asd, touch_d_td, gaze_d_td)
    jax.block_until_ready((pred_asd, pred_td))

    ref_asd, ref_td = _reference_forward(
        params, touch_d_asd, gaze_d_asd, touch_d_td, gaze_d_td)
    assert pred_asd.shape == (bs * num_ts // 25, 1)
    assert pred_td.shape == (bs * num_ts // 25, 1)
    assert jnp.allclose(pred_asd, ref_asd, atol=1e-5, rtol=1e-4)
    assert jnp.allclose(pred_td, ref_td, atol=1e-5, rtol=1e-4)

    # Case 2: larger shapes. Run once with the default tiling (>= 2 parallel
    # tiles + padded tail) and once with a tiny tile to exercise many tiles.
    k5, k6, k7, k8 = jax.random.split(jax.random.PRNGKey(1), 4)
    bs2, num_ts2 = 4, 125
    t_asd2 = jax.random.normal(k5, (bs2, num_ts2, 4), jnp.float32)
    g_asd2 = jax.random.normal(k6, (bs2, num_ts2, 5), jnp.float32)
    t_td2 = jax.random.normal(k7, (bs2, num_ts2, 4), jnp.float32)
    g_td2 = jax.random.normal(k8, (bs2, num_ts2, 5), jnp.float32)
    r_asd2, r_td2 = _reference_forward(params, t_asd2, g_asd2, t_td2, g_td2)

    p_asd2, p_td2 = asd_td_cnp_forward(
        params, t_asd2, g_asd2, t_td2, g_td2)            # default tiling
    jax.block_until_ready((p_asd2, p_td2))
    assert jnp.allclose(p_asd2, r_asd2, atol=1e-5, rtol=1e-4)
    assert jnp.allclose(p_td2, r_td2, atol=1e-5, rtol=1e-4)

    p_asd3, p_td3 = asd_td_cnp_forward(
        params, t_asd2, g_asd2, t_td2, g_td2, tile_bags=8)  # many small tiles
    jax.block_until_ready((p_asd3, p_td3))
    assert jnp.allclose(p_asd3, r_asd2, atol=1e-5, rtol=1e-4)
    assert jnp.allclose(p_td3, r_td2, atol=1e-5, rtol=1e-4)

    print("KERNEL_OK")
</pallas_src>

<mosaic_0001>
module attributes {stable_mosaic.version = 11 : i64} {
  func.func @_cnp_fused_kernel(%arg0: i32, %arg1: memref<200x4xf32, #tpu.memory_space<vmem>>, %arg2: memref<200x5xf32, #tpu.memory_space<vmem>>, %arg3: memref<8x200xf32, #tpu.memory_space<vmem>>, %arg4: memref<4x64xf32, #tpu.memory_space<vmem>>, %arg5: memref<5x64xf32, #tpu.memory_space<vmem>>, %arg6: memref<1x64xf32, #tpu.memory_space<vmem>>, %arg7: memref<64x32xf32, #tpu.memory_space<vmem>>, %arg8: memref<1x32xf32, #tpu.memory_space<vmem>>, %arg9: memref<1x32xf32, #tpu.memory_space<vmem>>, %arg10: memref<1x1xf32, #tpu.memory_space<vmem>>, %arg11: memref<8x1xf32, #tpu.memory_space<vmem>>) attributes {dimension_semantics = [#tpu.dimension_semantics<parallel>], iteration_bounds = array<i64: 1>, scalar_prefetch = 0 : i64, scratch_operands = 0 : i64, tpu.core_type = #tpu.core_type<tc>, window_params = [{transform_indices = @transform_0, window_bounds = array<i64: 200, 4>}, {transform_indices = @transform_1, window_bounds = array<i64: 200, 5>}, {pipeline_mode = #tpu.pipeline_mode<synchronous>, transform_indices = @transform_2, window_bounds = array<i64: 8, 200>}, {pipeline_mode = #tpu.pipeline_mode<synchronous>, transform_indices = @transform_3, window_bounds = array<i64: 4, 64>}, {pipeline_mode = #tpu.pipeline_mode<synchronous>, transform_indices = @transform_4, window_bounds = array<i64: 5, 64>}, {pipeline_mode = #tpu.pipeline_mode<synchronous>, transform_indices = @transform_5, window_bounds = array<i64: 1, 64>}, {pipeline_mode = #tpu.pipeline_mode<synchronous>, transform_indices = @transform_6, window_bounds = array<i64: 64, 32>}, {pipeline_mode = #tpu.pipeline_mode<synchronous>, transform_indices = @transform_7, window_bounds = array<i64: 1, 32>}, {pipeline_mode = #tpu.pipeline_mode<synchronous>, transform_indices = @transform_8, window_bounds = array<i64: 1, 32>}, {pipeline_mode = #tpu.pipeline_mode<synchronous>, transform_indices = @transform_9, window_bounds = array<i64: 1, 1>}, {transform_indices = @transform_10, window_bounds = array<i64: 8, 1>}]} {
    %c0 = arith.constant 0 : index
    %c0_0 = arith.constant 0 : index
    %0 = vector.load %arg1[%c0, %c0_0] : memref<200x4xf32, #tpu.memory_space<vmem>>, vector<200x4xf32>
    %c0_1 = arith.constant 0 : index
    %c0_2 = arith.constant 0 : index
    %1 = vector.load %arg4[%c0_1, %c0_2] : memref<4x64xf32, #tpu.memory_space<vmem>>, vector<4x64xf32>
    %cst = arith.constant dense<0.000000e+00> : vector<200x64xf32>
    %2 = tpu.matmul %0, %1, %cst {dimension_numbers = #tpu.dot_dimension_numbers<[1], [0], [0], [1], [0, 0, 1, 1], [], []>} : vector<200x4xf32>, vector<4x64xf32>, vector<200x64xf32> -> vector<200x64xf32>
    %c0_3 = arith.constant 0 : index
    %c0_4 = arith.constant 0 : index
    %3 = vector.load %arg2[%c0_3, %c0_4] : memref<200x5xf32, #tpu.memory_space<vmem>>, vector<200x5xf32>
    %c0_5 = arith.constant 0 : index
    %c0_6 = arith.constant 0 : index
    %4 = vector.load %arg5[%c0_5, %c0_6] : memref<5x64xf32, #tpu.memory_space<vmem>>, vector<5x64xf32>
    %cst_7 = arith.constant dense<0.000000e+00> : vector<200x64xf32>
    %5 = tpu.matmul %3, %4, %cst_7 {dimension_numbers = #tpu.dot_dimension_numbers<[1], [0], [0], [1], [0, 0, 1, 1], [], []>} : vector<200x5xf32>, vector<5x64xf32>, vector<200x64xf32> -> vector<200x64xf32>
    %6 = arith.addf %2, %5 : vector<200x64xf32>
    %c0_8 = arith.constant 0 : index
    %c0_9 = arith.constant 0 : index
    %7 = vector.load %arg6[%c0_8, %c0_9] : memref<1x64xf32, #tpu.memory_space<vmem>>, vector<1x64xf32>
    %8 = vector.broadcast %7 : vector<1x64xf32> to vector<200x64xf32>
    %9 = arith.addf %6, %8 : vector<200x64xf32>
    %cst_10 = arith.constant 0.000000e+00 : f32
    %10 = vector.broadcast %cst_10 : f32 to vector<200x64xf32>
    %11 = arith.maximumf %9, %10 : vector<200x64xf32>
    %c0_11 = arith.constant 0 : index
    %c0_12 = arith.constant 0 : index
    %12 = vector.load %arg3[%c0_11, %c0_12] : memref<8x200xf32, #tpu.memory_space<vmem>>, vector<8x200xf32>
    %cst_13 = arith.constant dense<0.000000e+00> : vector<8x64xf32>
    %13 = tpu.matmul %12, %11, %cst_13 {dimension_numbers = #tpu.dot_dimension_numbers<[1], [0], [0], [1], [0, 0, 1, 1], [], []>} : vector<8x200xf32>, vector<200x64xf32>, vector<8x64xf32> -> vector<8x64xf32>
    %c0_14 = arith.constant 0 : index
    %c0_15 = arith.constant 0 : index
    %14 = vector.load %arg7[%c0_14, %c0_15] : memref<64x32xf32, #tpu.memory_space<vmem>>, vector<64x32xf32>
    %cst_16 = arith.constant dense<0.000000e+00> : vector<8x32xf32>
    %15 = tpu.matmul %13, %14, %cst_16 {dimension_numbers = #tpu.dot_dimension_numbers<[1], [0], [0], [1], [0, 0, 1, 1], [], []>} : vector<8x64xf32>, vector<64x32xf32>, vector<8x32xf32> -> vector<8x32xf32>
    %c0_17 = arith.constant 0 : index
    %c0_18 = arith.constant 0 : index
    %16 = vector.load %arg8[%c0_17, %c0_18] : memref<1x32xf32, #tpu.memory_space<vmem>>, vector<1x32xf32>
    %17 = vector.broadcast %16 : vector<1x32xf32> to vector<8x32xf32>
    %18 = arith.addf %15, %17 : vector<8x32xf32>
    %cst_19 = arith.constant 0.000000e+00 : f32
    %19 = vector.broadcast %cst_19 : f32 to vector<8x32xf32>
    %20 = arith.maximumf %18, %19 : vector<8x32xf32>
    %c0_20 = arith.constant 0 : index
    %c0_21 = arith.constant 0 : index
    %21 = vector.load %arg9[%c0_20, %c0_21] : memref<1x32xf32, #tpu.memory_space<vmem>>, vector<1x32xf32>
    %22 = vector.broadcast %21 : vector<1x32xf32> to vector<8x32xf32>
    %23 = arith.mulf %20, %22 : vector<8x32xf32>
    %cst_22 = arith.constant dense<0.000000e+00> : vector<8xf32>
    %24 = vector.multi_reduction <add>, %23, %cst_22 [1] : vector<8x32xf32> to vector<8xf32>
    %25 = vector.shape_cast %24 : vector<8xf32> to vector<8x1xf32>
    %c0_23 = arith.constant 0 : index
    %c0_24 = arith.constant 0 : index
    %26 = vector.load %arg10[%c0_23, %c0_24] : memref<1x1xf32, #tpu.memory_space<vmem>>, vector<1x1xf32>
    %27 = vector.broadcast %26 : vector<1x1xf32> to vector<8x1xf32>
    %28 = arith.addf %25, %27 : vector<8x1xf32>
    %29 = arith.negf %28 : vector<8x1xf32>
    %30 = math.exp %29 : vector<8x1xf32>
    %cst_25 = arith.constant 1.000000e+00 : f32
    %31 = vector.broadcast %cst_25 : f32 to vector<8x1xf32>
    %32 = arith.addf %31, %30 : vector<8x1xf32>
    %33 = arith.divf %31, %32 : vector<8x1xf32>
    %c0_26 = arith.constant 0 : index
    %c0_27 = arith.constant 0 : index
    %34 = vector.load %arg11[%c0_26, %c0_27] : memref<8x1xf32, #tpu.memory_space<vmem>>, vector<8x1xf32>
    tpu.vector_store %arg11[%c0_26, %c0_27], %33 {strides = array<i32>} : memref<8x1xf32, #tpu.memory_space<vmem>>, vector<8x1xf32>,
    return
  }
  func.func @transform_0(%arg0: i32) -> (i32, i32) {
    %c0_i32 = arith.constant 0 : i32
    %c0_i32_0 = arith.constant 0 : i32
    return %arg0, %c0_i32 : i32, i32
  }
  func.func @transform_1(%arg0: i32) -> (i32, i32) {
    %c0_i32 = arith.constant 0 : i32
    %c0_i32_0 = arith.constant 0 : i32
    return %arg0, %c0_i32 : i32, i32
  }
  func.func @transform_2(%arg0: i32) -> (i32, i32) {
    %c0_i32 = arith.constant 0 : i32
    %c0_i32_0 = arith.constant 0 : i32
    %c0_i32_1 = arith.constant 0 : i32
    return %c0_i32, %c0_i32_0 : i32, i32
  }
  func.func @transform_3(%arg0: i32) -> (i32, i32) {
    %c0_i32 = arith.constant 0 : i32
    %c0_i32_0 = arith.constant 0 : i32
    %c0_i32_1 = arith.constant 0 : i32
    return %c0_i32, %c0_i32_0 : i32, i32
  }
  func.func @transform_4(%arg0: i32) -> (i32, i32) {
    %c0_i32 = arith.constant 0 : i32
    %c0_i32_0 = arith.constant 0 : i32
    %c0_i32_1 = arith.constant 0 : i32
    return %c0_i32, %c0_i32_0 : i32, i32
  }
  func.func @transform_5(%arg0: i32) -> (i32, i32) {
    %c0_i32 = arith.constant 0 : i32
    %c0_i32_0 = arith.constant 0 : i32
    %c0_i32_1 = arith.constant 0 : i32
    return %c0_i32, %c0_i32_0 : i32, i32
  }
  func.func @transform_6(%arg0: i32) -> (i32, i32) {
    %c0_i32 = arith.constant 0 : i32
    %c0_i32_0 = arith.constant 0 : i32
    %c0_i32_1 = arith.constant 0 : i32
    return %c0_i32, %c0_i32_0 : i32, i32
  }
  func.func @transform_7(%arg0: i32) -> (i32, i32) {
    %c0_i32 = arith.constant 0 : i32
    %c0_i32_0 = arith.constant 0 : i32
    %c0_i32_1 = arith.constant 0 : i32
    return %c0_i32, %c0_i32_0 : i32, i32
  }
  func.func @transform_8(%arg0: i32) -> (i32, i32) {
    %c0_i32 = arith.constant 0 : i32
    %c0_i32_0 = arith.constant 0 : i32
    %c0_i32_1 = arith.constant 0 : i32
    return %c0_i32, %c0_i32_0 : i32, i32
  }
  func.func @transform_9(%arg0: i32) -> (i32, i32) {
    %c0_i32 = arith.constant 0 : i32
    %c0_i32_0 = arith.constant 0 : i32
    %c0_i32_1 = arith.constant 0 : i32
    return %c0_i32, %c0_i32_0 : i32, i32
  }
  func.func @transform_10(%arg0: i32) -> (i32, i32) {
    %c0_i32 = arith.constant 0 : i32
    %c0_i32_0 = arith.constant 0 : i32
    return %arg0, %c0_i32 : i32, i32
  }
}

</mosaic_0001>

<llo_original>
// kernel: tpu_custom_call.1
$region0: #{tpu_custom_call.1}
  #allocation0 [shape = 'u32[]', space=smem, size = 0x4, offset = 0x4, fixed_abs, tag = 'smem constant byte address 0x4 - core index']
  #allocation1 [shape = 'u32[144,128]{1,0:T(1,128)}', space=vmem, size = 0x12000, scoped, tag = 'internal scratch']
  #allocation2 [shape = 'f32[1,1]{1,0:T(1,128)S(1)}', space=vmem, size = 0x200, scoped, tag = 'scoped memory for tpu_custom_call.1']
  %s0 = inlined_call_operand.vmem [shape: f32[200,4], index: 0, kind: input, shape index: {}]
  %s1 = inlined_call_operand.vmem [shape: f32[200,5], index: 1, kind: input, shape index: {}]
  %s2 = inlined_call_operand.vmem [shape: f32[8,200], index: 2, kind: input, shape index: {}]
  %s3 = inlined_call_operand.vmem [shape: f32[4,64], index: 3, kind: input, shape index: {}]
  %s4 = inlined_call_operand.vmem [shape: f32[5,64], index: 4, kind: input, shape index: {}]
  %s5 = inlined_call_operand.vmem [shape: f32[1,64], index: 5, kind: input, shape index: {}]
  %s6 = inlined_call_operand.vmem [shape: f32[64,32], index: 6, kind: input, shape index: {}]
  %s7 = inlined_call_operand.vmem [shape: f32[1,32], index: 7, kind: input, shape index: {}]
  %s8 = inlined_call_operand.vmem [shape: f32[1,32], index: 8, kind: input, shape index: {}]
  %s9 = inlined_call_operand.<no memory space> [shape: f32[1,1], index: 9, kind: input, shape index: {}]
  %s10 = inlined_call_operand.vmem [shape: f32[8,1], index: 10, kind: output, shape index: {}]
  %s11 = sld [smem:[#allocation0]]
  $region50: #{tpu_custom_call.1} parent=0
    _
  %s13 = ssub.s32 1, %s11
  %s14 = scalar_select 0, %s13, %s11
  %v15 = vstv %s9
  %16 = vst [vmem:[#allocation2] sm:$0x1] %v15
  // Predicated region
  $region2: #{tpu_custom_call.1} parent=0 // pred_check
    _
  $region3: #{tpu_custom_call.1} parent=0 // pred_check_branch
    %18 = sbr.rel (0) target = $region5
  $region4: #{tpu_custom_call.1} parent=0 // pred_region
    _
  $region5: #{tpu_custom_call.1} parent=0 // pred_fallthru
    _
  // Predicated region
  $region6: #{tpu_custom_call.1} parent=0 // pred_check
    _
  $region7: #{tpu_custom_call.1} parent=0 // pred_check_branch
    %20 = sbr.rel (0) target = $region9
  $region8: #{tpu_custom_call.1} parent=0 // pred_region
    _
  $region9: #{tpu_custom_call.1} parent=0 // pred_fallthru
    _
  // Predicated region
  $region10: #{tpu_custom_call.1} parent=0 // pred_check
    _
  $region11: #{tpu_custom_call.1} parent=0 // pred_check_branch
    %22 = sbr.rel (0) target = $region13
  $region12: #{tpu_custom_call.1} parent=0 // pred_region
    _
  $region13: #{tpu_custom_call.1} parent=0 // pred_fallthru
    _
  // Predicated region
  $region14: #{tpu_custom_call.1} parent=0 // pred_check
    _
  $region15: #{tpu_custom_call.1} parent=0 // pred_check_branch
    %24 = sbr.rel (0) target = $region17
  $region16: #{tpu_custom_call.1} parent=0 // pred_region
    _
  $region17: #{tpu_custom_call.1} parent=0 // pred_fallthru
    _
  // Predicated region
  $region18: #{tpu_custom_call.1} parent=0 // pred_check
    _
  $region19: #{tpu_custom_call.1} parent=0 // pred_check_branch
    %26 = sbr.rel (0) target = $region21
  $region20: #{tpu_custom_call.1} parent=0 // pred_region
    _
  $region21: #{tpu_custom_call.1} parent=0 // pred_fallthru
    _
  // Predicated region
  $region22: #{tpu_custom_call.1} parent=0 // pred_check
    _
  $region23: #{tpu_custom_call.1} parent=0 // pred_check_branch
    %28 = sbr.rel (0) target = $region25
  $region24: #{tpu_custom_call.1} parent=0 // pred_region
    _
  $region25: #{tpu_custom_call.1} parent=0 // pred_fallthru
    _
  // Predicated region
  $region26: #{tpu_custom_call.1} parent=0 // pred_check
    _
  $region27: #{tpu_custom_call.1} parent=0 // pred_check_branch
    %30 = sbr.rel (0) target = $region29
  $region28: #{tpu_custom_call.1} parent=0 // pred_region
    _
  $region29: #{tpu_custom_call.1} parent=0 // pred_fallthru
    _
  // Predicated region
  $region30: #{tpu_custom_call.1} parent=0 // pred_check
    _
  $region31: #{tpu_custom_call.1} parent=0 // pred_check_branch
    %32 = sbr.rel (0) target = $region33
  $region32: #{tpu_custom_call.1} parent=0 // pred_region
    _
  $region33: #{tpu_custom_call.1} parent=0 // pred_fallthru
    _
  // Predicated region
  $region34: #{tpu_custom_call.1} parent=0 // pred_check
    _
  $region35: #{tpu_custom_call.1} parent=0 // pred_check_branch
    %34 = sbr.rel (0) target = $region37
  $region36: #{tpu_custom_call.1} parent=0 // pred_region
    _
  $region37: #{tpu_custom_call.1} parent=0 // pred_fallthru
    _
  // Predicated region
  $region38: #{tpu_custom_call.1} parent=0 // pred_check
    _
  $region39: #{tpu_custom_call.1} parent=0 // pred_check_branch
    %36 = sbr.rel (0) target = $region41
  $region40: #{tpu_custom_call.1} parent=0 // pred_region
    _
  $region41: #{tpu_custom_call.1} parent=0 // pred_fallthru
    _
  %v37 = vld [vmem:[%s0] sm:$0xff]
  %v38 = vld [vmem:[%s0 + $0x8] sm:$0xff]
  %v39 = vld [vmem:[%s0 + $0x10] sm:$0xff]
  %v40 = vld [vmem:[%s0 + $0x18] sm:$0xff]
  %v41 = vld [vmem:[%s0 + $0x20] sm:$0xff]
  %v42 = vld [vmem:[%s0 + $0x28] sm:$0xff]
  %v43 = vld [vmem:[%s0 + $0x30] sm:$0xff]
  %v44 = vld [vmem:[%s0 + $0x38] sm:$0xff]
  %v45 = vld [vmem:[%s0 + $0x40] sm:$0xff]
  %v46 = vld [vmem:[%s0 + $0x48] sm:$0xff]
  %v47 = vld [vmem:[%s0 + $0x50] sm:$0xff]
  %v48 = vld [vmem:[%s0 + $0x58] sm:$0xff]
  %v49 = vld [vmem:[%s0 + $0x60] sm:$0xff]
  %v50 = vld [vmem:[%s0 + $0x68] sm:$0xff]
  %v51 = vld [vmem:[%s0 + $0x70] sm:$0xff]
  %v52 = vld [vmem:[%s0 + $0x78] sm:$0xff]
  %v53 = vld [vmem:[%s0 + $0x80] sm:$0xff]
  %v54 = vld [vmem:[%s0 + $0x88] sm:$0xff]
  %v55 = vld [vmem:[%s0 + $0x90] sm:$0xff]
  %v56 = vld [vmem:[%s0 + $0x98] sm:$0xff]
  %v57 = vld [vmem:[%s0 + $0xa0] sm:$0xff]
  %v58 = vld [vmem:[%s0 + $0xa8] sm:$0xff]
  %v59 = vld [vmem:[%s0 + $0xb0] sm:$0xff]
  %v60 = vld [vmem:[%s0 + $0xb8] sm:$0xff]
  %v61 = vld [vmem:[%s0 + $0xc0] sm:$0xff]
  %v62 = vld [vmem:[%s3] sm:$0xf]
  %v63 = vld [vmem:[%s1] sm:$0xff]
  %v64 = vld [vmem:[%s1 + $0x8] sm:$0xff]
  %v65 = vld [vmem:[%s1 + $0x10] sm:$0xff]
  %v66 = vld [vmem:[%s1 + $0x18] sm:$0xff]
  %v67 = vld [vmem:[%s1 + $0x20] sm:$0xff]
  %v68 = vld [vmem:[%s1 + $0x28] sm:$0xff]
  %v69 = vld [vmem:[%s1 + $0x30] sm:$0xff]
  %v70 = vld [vmem:[%s1 + $0x38] sm:$0xff]
  %v71 = vld [vmem:[%s1 + $0x40] sm:$0xff]
  %v72 = vld [vmem:[%s1 + $0x48] sm:$0xff]
  %v73 = vld [vmem:[%s1 + $0x50] sm:$0xff]
  %v74 = vld [vmem:[%s1 + $0x58] sm:$0xff]
  %v75 = vld [vmem:[%s1 + $0x60] sm:$0xff]
  %v76 = vld [vmem:[%s1 + $0x68] sm:$0xff]
  %v77 = vld [vmem:[%s1 + $0x70] sm:$0xff]
  %v78 = vld [vmem:[%s1 + $0x78] sm:$0xff]
  %v79 = vld [vmem:[%s1 + $0x80] sm:$0xff]
  %v80 = vld [vmem:[%s1 + $0x88] sm:$0xff]
  %v81 = vld [vmem:[%s1 + $0x90] sm:$0xff]
  %v82 = vld [vmem:[%s1 + $0x98] sm:$0xff]
  %v83 = vld [vmem:[%s1 + $0xa0] sm:$0xff]
  %v84 = vld [vmem:[%s1 + $0xa8] sm:$0xff]
  %v85 = vld [vmem:[%s1 + $0xb0] sm:$0xff]
  %v86 = vld [vmem:[%s1 + $0xb8] sm:$0xff]
  %v87 = vld [vmem:[%s1 + $0xc0] sm:$0xff]
  %v88 = vld [vmem:[%s4] sm:$0x1f]
  %vm89 = vcmask 39936
  %v91 = vsel %vm89, %v63, 0
  %v94 = vsel %vm89, %v64, 0
  %v97 = vsel %vm89, %v65, 0
  %v100 = vsel %vm89, %v66, 0
  %v103 = vsel %vm89, %v67, 0
  %v106 = vsel %vm89, %v68, 0
  %v109 = vsel %vm89, %v69, 0
  %v112 = vsel %vm89, %v70, 0
  %v115 = vsel %vm89, %v71, 0
  %v118 = vsel %vm89, %v72, 0
  %v121 = vsel %vm89, %v73, 0
  %v124 = vsel %vm89, %v74, 0
  %v127 = vsel %vm89, %v75, 0
  %v130 = vsel %vm89, %v76, 0
  %v133 = vsel %vm89, %v77, 0
  %v136 = vsel %vm89, %v78, 0
  %v139 = vsel %vm89, %v79, 0
  %v142 = vsel %vm89, %v80, 0
  %v145 = vsel %vm89, %v81, 0
  %v148 = vsel %vm89, %v82, 0
  %v151 = vsel %vm89, %v83, 0
  %v154 = vsel %vm89, %v84, 0
  %v157 = vsel %vm89, %v85, 0
  %v160 = vsel %vm89, %v86, 0
  %v163 = vsel %vm89, %v87, 0
  %vm165 = vcmask 1044480
  %v167 = vsel %vm165, %v88, 0
  %169 = vmatprep.subr.mxu0 0.0
  %170 = vmatpush1.msra.mxu0 %v167
  %171 = vmatprep.subr.mxu0 0.0
  %172 = vmatpush1.msra.mxu0 0.0
  %173 = vmatprep.subr.mxu0 0.0
  %174 = vmatpush1.msra.mxu0 0.0
  %175 = vmatprep.subr.mxu0 0.0
  %176 = vmatpush1.msra.mxu0 0.0
  %177 = vmatprep.subr.mxu0 0.0
  %178 = vmatpush1.msra.mxu0 0.0
  %179 = vmatprep.subr.mxu0 0.0
  %180 = vmatpush1.msra.mxu0 0.0
  %181 = vmatprep.subr.mxu0 0.0
  %182 = vmatpush1.msra.mxu0 0.0
  %183 = vmatprep.subr.mxu0 0.0
  %184 = vmatpush1.msra.mxu0 0.0
  %185 = vmatprep.subr.mxu0 0.0
  %186 = vmatpush1.msra.mxu0 0.0
  %187 = vmatprep.subr.mxu0 0.0
  %188 = vmatpush1.msra.mxu0 0.0
  %189 = vmatprep.subr.mxu0 0.0
  %190 = vmatpush1.msra.mxu0 0.0
  %191 = vmatprep.subr.mxu0 0.0
  %192 = vmatpush1.msra.mxu0 0.0
  %193 = vmatprep.subr.mxu0 0.0
  %194 = vmatpush1.msra.mxu0 0.0
  %195 = vmatprep.subr.mxu0 0.0
  %196 = vmatpush1.msra.mxu0 0.0
  %197 = vmatprep.subr.mxu0 0.0
  %198 = vmatpush1.msra.mxu0 0.0
  %199 = vmatprep.subr.mxu0 0.0
  %200 = vmatpush1.msra.mxu0 0.0
  %201 = vmatprep.subr.mxu0 0.0
  %202 = vmatpush1.msra.mxu0 0.0
  %203 = vmatprep.subr.mxu0 0.0
  %204 = vmatpush1.msra.mxu0 0.0
  %205 = vmatprep.subr.mxu0 0.0
  %206 = vmatpush1.msra.mxu0 0.0
  %207 = vmatprep.subr.mxu0 0.0
  %208 = vmatpush1.msra.mxu0 0.0
  %209 = vmatprep.subr.mxu0 0.0
  %210 = vmatpush1.msra.mxu0 0.0
  %211 = vmatprep.subr.mxu0 0.0
  %212 = vmatpush1.msra.mxu0 0.0
  %213 = vmatprep.subr.mxu0 0.0
  %214 = vmatpush1.msra.mxu0 0.0
  %215 = vmatprep.subr.mxu0 0.0
  %216 = vmatpush1.msra.mxu0 0.0
  %217 = vmatprep.subr.mxu0 0.0
  %218 = vmatpush1.msra.mxu0 0.0
  %219 = vmatprep.subr.mxu0 0.0
  %220 = vmatpush1.msra.mxu0 0.0
  %221 = vmatprep.subr.mxu0 0.0
  %222 = vmatpush1.msra.mxu0 0.0
  %223 = vmatprep.subr.mxu0 0.0
  %224 = vmatpush1.msra.mxu0 0.0
  %225 = vmatprep.subr.mxu0 0.0
  %226 = vmatpush1.msra.mxu0 0.0
  %227 = vmatprep.subr.mxu0 0.0
  %228 = vmatpush1.msra.mxu0 0.0
  %229 = vmatprep.subr.mxu0 0.0
  %230 = vmatpush1.msra.mxu0 0.0
  %231 = vmatprep.subr.mxu0 0.0
  %232 = vmatpush1.msra.mxu0 0.0
  %233 = vmatprep.mubr.f32.mxu0 0.0
  %234 = vmatmul.mubr.f32.gmra.mrb[0].mxu0 %v91
  %v235 = vpop.f32.mrb[0].mxu0
  %v236 = vadd.f32 0.0, %v235
  %v237 = vpop.f32.mrb[0].mxu0
  %238 = vmatprep.mubr.f32.mxu0 0.0
  %239 = vmatmul.mubr.f32.gmra.mrb[0].mxu0 %v94
  %v240 = vpop.f32.mrb[0].mxu0
  %v241 = vadd.f32 0.0, %v240
  %v242 = vpop.f32.mrb[0].mxu0
  %243 = vmatprep.mubr.f32.mxu0 0.0
  %244 = vmatmul.mubr.f32.gmra.mrb[0].mxu0 %v97
  %v245 = vpop.f32.mrb[0].mxu0
  %v246 = vadd.f32 0.0, %v245
  %v247 = vpop.f32.mrb[0].mxu0
  %248 = vmatprep.mubr.f32.mxu0 0.0
  %249 = vmatmul.mubr.f32.gmra.mrb[0].mxu0 %v100
  %v250 = vpop.f32.mrb[0].mxu0
  %v251 = vadd.f32 0.0, %v250
  %v252 = vpop.f32.mrb[0].mxu0
  %253 = vmatprep.mubr.f32.mxu0 0.0
  %254 = vmatmul.mubr.f32.gmra.mrb[0].mxu0 %v103
  %v255 = vpop.f32.mrb[0].mxu0
  %v256 = vadd.f32 0.0, %v255
  %v257 = vpop.f32.mrb[0].mxu0
  %258 = vmatprep.mubr.f32.mxu0 0.0
  %259 = vmatmul.mubr.f32.gmra.mrb[0].mxu0 %v106
  %v260 = vpop.f32.mrb[0].mxu0
  %v261 = vadd.f32 0.0, %v260
  %v262 = vpop.f32.mrb[0].mxu0
  %263 = vmatprep.mubr.f32.mxu0 0.0
  %264 = vmatmul.mubr.f32.gmra.mrb[0].mxu0 %v109
  %v265 = vpop.f32.mrb[0].mxu0
  %v266 = vadd.f32 0.0, %v265
  %v267 = vpop.f32.mrb[0].mxu0
  %268 = vmatprep.mubr.f32.mxu0 0.0
  %269 = vmatmul.mubr.f32.gmra.mrb[0].mxu0 %v112
  %v270 = vpop.f32.mrb[0].mxu0
  %v271 = vadd.f32 0.0, %v270
  %v272 = vpop.f32.mrb[0].mxu0
  %273 = vmatprep.mubr.f32.mxu0 0.0
  %274 = vmatmul.mubr.f32.gmra.mrb[0].mxu0 %v115
  %v275 = vpop.f32.mrb[0].mxu0
  %v276 = vadd.f32 0.0, %v275
  %v277 = vpop.f32.mrb[0].mxu0
  %278 = vmatprep.mubr.f32.mxu0 0.0
  %279 = vmatmul.mubr.f32.gmra.mrb[0].mxu0 %v118
  %v280 = vpop.f32.mrb[0].mxu0
  %v281 = vadd.f32 0.0, %v280
  %v282 = vpop.f32.mrb[0].mxu0
  %283 = vmatprep.mubr.f32.mxu0 0.0
  %284 = vmatmul.mubr.f32.gmra.mrb[0].mxu0 %v121
  %v285 = vpop.f32.mrb[0].mxu0
  %v286 = vadd.f32 0.0, %v285
  %v287 = vpop.f32.mrb[0].mxu0
  %288 = vmatprep.mubr.f32.mxu0 0.0
  %289 = vmatmul.mubr.f32.gmra.mrb[0].mxu0 %v124
  %v290 = vpop.f32.mrb[0].mxu0
  %v291 = vadd.f32 0.0, %v290
  %v292 = vpop.f32.mrb[0].mxu0
  %293 = vmatprep.mubr.f32.mxu0 0.0
  %294 = vmatmul.mubr.f32.gmra.mrb[0].mxu0 %v127
  %v295 = vpop.f32.mrb[0].mxu0
  %v296 = vadd.f32 0.0, %v295
  %v297 = vpop.f32.mrb[0].mxu0
  %298 = vmatprep.mubr.f32.mxu0 0.0
  %299 = vmatmul.mubr.f32.gmra.mrb[0].mxu0 %v130
  %v300 = vpop.f32.mrb[0].mxu0
  %v301 = vadd.f32 0.0, %v300
  %v302 = vpop.f32.mrb[0].mxu0
  %303 = vmatprep.mubr.f32.mxu0 0.0
  %304 = vmatmul.mubr.f32.gmra.mrb[0].mxu0 %v133
  %v305 = vpop.f32.mrb[0].mxu0
  %v306 = vadd.f32 0.0, %v305
  %v307 = vpop.f32.mrb[0].mxu0
  %308 = vmatprep.mubr.f32.mxu0 0.0
  %309 = vmatmul.mubr.f32.gmra.mrb[0].mxu0 %v136
  %v310 = vpop.f32.mrb[0].mxu0
  %v311 = vadd.f32 0.0, %v310
  %v312 = vpop.f32.mrb[0].mxu0
  %313 = vmatprep.mubr.f32.mxu0 0.0
  %314 = vmatmul.mubr.f32.gmra.mrb[0].mxu0 %v139
  %v315 = vpop.f32.mrb[0].mxu0
  %v316 = vadd.f32 0.0, %v315
  %v317 = vpop.f32.mrb[0].mxu0
  %318 = vmatprep.mubr.f32.mxu0 0.0
  %319 = vmatmul.mubr.f32.gmra.mrb[0].mxu0 %v142
  %v320 = vpop.f32.mrb[0].mxu0
  %v321 = vadd.f32 0.0, %v320
  %v322 = vpop.f32.mrb[0].mxu0
  %323 = vmatprep.mubr.f32.mxu0 0.0
  %324 = vmatmul.mubr.f32.gmra.mrb[0].mxu0 %v145
  %v325 = vpop.f32.mrb[0].mxu0
  %v326 = vadd.f32 0.0, %v325
  %v327 = vpop.f32.mrb[0].mxu0
  %328 = vmatprep.mubr.f32.mxu0 0.0
  %329 = vmatmul.mubr.f32.gmra.mrb[0].mxu0 %v148
  %v330 = vpop.f32.mrb[0].mxu0
  %v331 = vadd.f32 0.0, %v330
  %v332 = vpop.f32.mrb[0].mxu0
  %333 = vmatprep.mubr.f32.mxu0 0.0
  %334 = vmatmul.mubr.f32.gmra.mrb[0].mxu0 %v151
  %v335 = vpop.f32.mrb[0].mxu0
  %v336 = vadd.f32 0.0, %v335
  %v337 = vpop.f32.mrb[0].mxu0
  %338 = vmatprep.mubr.f32.mxu0 0.0
  %339 = vmatmul.mubr.f32.gmra.mrb[0].mxu0 %v154
  %v340 = vpop.f32.mrb[0].mxu0
  %v341 = vadd.f32 0.0, %v340
  %v342 = vpop.f32.mrb[0].mxu0
  %343 = vmatprep.mubr.f32.mxu0 0.0
  %344 = vmatmul.mubr.f32.gmra.mrb[0].mxu0 %v157
  %v345 = vpop.f32.mrb[0].mxu0
  %v346 = vadd.f32 0.0, %v345
  %v347 = vpop.f32.mrb[0].mxu0
  %348 = vmatprep.mubr.f32.mxu0 0.0
  %349 = vmatmul.mubr.f32.gmra.mrb[0].mxu0 %v160
  %v350 = vpop.f32.mrb[0].mxu0
  %v351 = vadd.f32 0.0, %v350
  %v352 = vpop.f32.mrb[0].mxu0
  %353 = vmatprep.mubr.f32.mxu0 0.0
  %354 = vmatmul.mubr.f32.gmra.mrb[0].mxu0 %v163
  %v355 = vpop.f32.mrb[0].mxu0
  %v356 = vadd.f32 0.0, %v355
  %v357 = vpop.f32.mrb[0].mxu0
  %358 = vdwg.mxu0
  %vm359 = vcmask 31744
  %v361 = vsel %vm359, %v37, 0
  %v364 = vsel %vm359, %v38, 0
  %v367 = vsel %vm359, %v39, 0
  %v370 = vsel %vm359, %v40, 0
  %v373 = vsel %vm359, %v41, 0
  %v376 = vsel %vm359, %v42, 0
  %v379 = vsel %vm359, %v43, 0
  %v382 = vsel %vm359, %v44, 0
  %v385 = vsel %vm359, %v45, 0
  %v388 = vsel %vm359, %v46, 0
  %v391 = vsel %vm359, %v47, 0
  %v394 = vsel %vm359, %v48, 0
  %v397 = vsel %vm359, %v49, 0
  %v400 = vsel %vm359, %v50, 0
  %v403 = vsel %vm359, %v51, 0
  %v406 = vsel %vm359, %v52, 0
  %v409 = vsel %vm359, %v53, 0
  %v412 = vsel %vm359, %v54, 0
  %v415 = vsel %vm359, %v55, 0
  %v418 = vsel %vm359, %v56, 0
  %v421 = vsel %vm359, %v57, 0
  %v424 = vsel %vm359, %v58, 0
  %v427 = vsel %vm359, %v59, 0
  %v430 = vsel %vm359, %v60, 0
  %v433 = vsel %vm359, %v61, 0
  %vm435 = vcmask 1043456
  %v437 = vsel %vm435, %v62, 0
  %439 = vmatprep.subr.mxu0 0.0
  %440 = vmatpush1.msra.mxu0 %v437
  %441 = vmatprep.subr.mxu0 0.0
  %442 = vmatpush1.msra.mxu0 0.0
  %443 = vmatprep.subr.mxu0 0.0
  %444 = vmatpush1.msra.mxu0 0.0
  %445 = vmatprep.subr.mxu0 0.0
  %446 = vmatpush1.msra.mxu0 0.0
  %447 = vmatprep.subr.mxu0 0.0
  %448 = vmatpush1.msra.mxu0 0.0
  %449 = vmatprep.subr.mxu0 0.0
  %450 = vmatpush1.msra.mxu0 0.0
  %451 = vmatprep.subr.mxu0 0.0
  %452 = vmatpush1.msra.mxu0 0.0
  %453 = vmatprep.subr.mxu0 0.0
  %454 = vmatpush1.msra.mxu0 0.0
  %455 = vmatprep.subr.mxu0 0.0
  %456 = vmatpush1.msra.mxu0 0.0
  %457 = vmatprep.subr.mxu0 0.0
  %458 = vmatpush1.msra.mxu0 0.0
  %459 = vmatprep.subr.mxu0 0.0
  %460 = vmatpush1.msra.mxu0 0.0
  %461 = vmatprep.subr.mxu0 0.0
  %462 = vmatpush1.msra.mxu0 0.0
  %463 = vmatprep.subr.mxu0 0.0
  %464 = vmatpush1.msra.mxu0 0.0
  %465 = vmatprep.subr.mxu0 0.0
  %466 = vmatpush1.msra.mxu0 0.0
  %467 = vmatprep.subr.mxu0 0.0
  %468 = vmatpush1.msra.mxu0 0.0
  %469 = vmatprep.subr.mxu0 0.0
  %470 = vmatpush1.msra.mxu0 0.0
  %471 = vmatprep.subr.mxu0 0.0
  %472 = vmatpush1.msra.mxu0 0.0
  %473 = vmatprep.subr.mxu0 0.0
  %474 = vmatpush1.msra.mxu0 0.0
  %475 = vmatprep.subr.mxu0 0.0
  %476 = vmatpush1.msra.mxu0 0.0
  %477 = vmatprep.subr.mxu0 0.0
  %478 = vmatpush1.msra.mxu0 0.0
  %479 = vmatprep.subr.mxu0 0.0
  %480 = vmatpush1.msra.mxu0 0.0
  %481 = vmatprep.subr.mxu0 0.0
  %482 = vmatpush1.msra.mxu0 0.0
  %483 = vmatprep.subr.mxu0 0.0
  %484 = vmatpush1.msra.mxu0 0.0
  %485 = vmatprep.subr.mxu0 0.0
  %486 = vmatpush1.msra.mxu0 0.0
  %487 = vmatprep.subr.mxu0 0.0
  %488 = vmatpush1.msra.mxu0 0.0
  %489 = vmatprep.subr.mxu0 0.0
  %490 = vmatpush1.msra.mxu0 0.0
  %491 = vmatprep.subr.mxu0 0.0
  %492 = vmatpush1.msra.mxu0 0.0
  %493 = vmatprep.subr.mxu0 0.0
  %494 = vmatpush1.msra.mxu0 0.0
  %495 = vmatprep.subr.mxu0 0.0
  %496 = vmatpush1.msra.mxu0 0.0
  %497 = vmatprep.subr.mxu0 0.0
  %498 = vmatpush1.msra.mxu0 0.0
  %499 = vmatprep.subr.mxu0 0.0
  %500 = vmatpush1.msra.mxu0 0.0
  %501 = vmatprep.subr.mxu0 0.0
  %502 = vmatpush1.msra.mxu0 0.0
  %503 = vmatprep.mubr.f32.mxu0 0.0
  %504 = vmatmul.mubr.f32.gmra.mrb[0].mxu0 %v361
  %v505 = vpop.f32.mrb[0].mxu0
  %v506 = vadd.f32 %v236, %v505
  %v507 = vpop.f32.mrb[0].mxu0
  %508 = vmatprep.mubr.f32.mxu0 0.0
  %509 = vmatmul.mubr.f32.gmra.mrb[0].mxu0 %v364
  %v510 = vpop.f32.mrb[0].mxu0
  %v511 = vadd.f32 %v241, %v510
  %v512 = vpop.f32.mrb[0].mxu0
  %513 = vmatprep.mubr.f32.mxu0 0.0
  %514 = vmatmul.mubr.f32.gmra.mrb[0].mxu0 %v367
  %v515 = vpop.f32.mrb[0].mxu0
  %v516 = vadd.f32 %v246, %v515
  %v517 = vpop.f32.mrb[0].mxu0
  %518 = vmatprep.mubr.f32.mxu0 0.0
  %519 = vmatmul.mubr.f32.gmra.mrb[0].mxu0 %v370
  %v520 = vpop.f32.mrb[0].mxu0
  %v521 = vadd.f32 %v251, %v520
  %v522 = vpop.f32.mrb[0].mxu0
  %523 = vmatprep.mubr.f32.mxu0 0.0
  %524 = vmatmul.mubr.f32.gmra.mrb[0].mxu0 %v373
  %v525 = vpop.f32.mrb[0].mxu0
  %v526 = vadd.f32 %v256, %v525
  %v527 = vpop.f32.mrb[0].mxu0
  %528 = vmatprep.mubr.f32.mxu0 0.0
  %529 = vmatmul.mubr.f32.gmra.mrb[0].mxu0 %v376
  %v530 = vpop.f32.mrb[0].mxu0
  %v531 = vadd.f32 %v261, %v530
  %v532 = vpop.f32.mrb[0].mxu0
  %533 = vmatprep.mubr.f32.mxu0 0.0
  %534 = vmatmul.mubr.f32.gmra.mrb[0].mxu0 %v379
  %v535 = vpop.f32.mrb[0].mxu0
  %v536 = vadd.f32 %v266, %v535
  %v537 = vpop.f32.mrb[0].mxu0
  %538 = vmatprep.mubr.f32.mxu0 0.0
  %539 = vmatmul.mubr.f32.gmra.mrb[0].mxu0 %v382
  %v540 = vpop.f32.mrb[0].mxu0
  %v541 = vadd.f32 %v271, %v540
  %v542 = vpop.f32.mrb[0].mxu0
  %543 = vmatprep.mubr.f32.mxu0 0.0
  %544 = vmatmul.mubr.f32.gmra.mrb[0].mxu0 %v385
  %v545 = vpop.f32.mrb[0].mxu0
  %v546 = vadd.f32 %v276, %v545
  %v547 = vpop.f32.mrb[0].mxu0
  %548 = vmatprep.mubr.f32.mxu0 0.0
  %549 = vmatmul.mubr.f32.gmra.mrb[0].mxu0 %v388
  %v550 = vpop.f32.mrb[0].mxu0
  %v551 = vadd.f32 %v281, %v550
  %v552 = vpop.f32.mrb[0].mxu0
  %553 = vmatprep.mubr.f32.mxu0 0.0
  %554 = vmatmul.mubr.f32.gmra.mrb[0].mxu0 %v391
  %v555 = vpop.f32.mrb[0].mxu0
  %v556 = vadd.f32 %v286, %v555
  %v557 = vpop.f32.mrb[0].mxu0
  %558 = vmatprep.mubr.f32.mxu0 0.0
  %559 = vmatmul.mubr.f32.gmra.mrb[0].mxu0 %v394
  %v560 = vpop.f32.mrb[0].mxu0
  %v561 = vadd.f32 %v291, %v560
  %v562 = vpop.f32.mrb[0].mxu0
  %563 = vmatprep.mubr.f32.mxu0 0.0
  %564 = vmatmul.mubr.f32.gmra.mrb[0].mxu0 %v397
  %v565 = vpop.f32.mrb[0].mxu0
  %v566 = vadd.f32 %v296, %v565
  %v567 = vpop.f32.mrb[0].mxu0
  %568 = vmatprep.mubr.f32.mxu0 0.0
  %569 = vmatmul.mubr.f32.gmra.mrb[0].mxu0 %v400
  %v570 = vpop.f32.mrb[0].mxu0
  %v571 = vadd.f32 %v301, %v570
  %v572 = vpop.f32.mrb[0].mxu0
  %573 = vmatprep.mubr.f32.mxu0 0.0
  %574 = vmatmul.mubr.f32.gmra.mrb[0].mxu0 %v403
  %v575 = vpop.f32.mrb[0].mxu0
  %v576 = vadd.f32 %v306, %v575
  %v577 = vpop.f32.mrb[0].mxu0
  %578 = vmatprep.mubr.f32.mxu0 0.0
  %579 = vmatmul.mubr.f32.gmra.mrb[0].mxu0 %v406
  %v580 = vpop.f32.mrb[0].mxu0
  %v581 = vadd.f32 %v311, %v580
  %v582 = vpop.f32.mrb[0].mxu0
  %583 = vmatprep.mubr.f32.mxu0 0.0
  %584 = vmatmul.mubr.f32.gmra.mrb[0].mxu0 %v409
  %v585 = vpop.f32.mrb[0].mxu0
  %v586 = vadd.f32 %v316, %v585
  %v587 = vpop.f32.mrb[0].mxu0
  %588 = vmatprep.mubr.f32.mxu0 0.0
  %589 = vmatmul.mubr.f32.gmra.mrb[0].mxu0 %v412
  %v590 = vpop.f32.mrb[0].mxu0
  %v591 = vadd.f32 %v321, %v590
  %v592 = vpop.f32.mrb[0].mxu0
  %593 = vmatprep.mubr.f32.mxu0 0.0
  %594 = vmatmul.mubr.f32.gmra.mrb[0].mxu0 %v415
  %v595 = vpop.f32.mrb[0].mxu0
  %v596 = vadd.f32 %v326, %v595
  %v597 = vpop.f32.mrb[0].mxu0
  %598 = vmatprep.mubr.f32.mxu0 0.0
  %599 = vmatmul.mubr.f32.gmra.mrb[0].mxu0 %v418
  %v600 = vpop.f32.mrb[0].mxu0
  %v601 = vadd.f32 %v331, %v600
  %v602 = vpop.f32.mrb[0].mxu0
  %603 = vmatprep.mubr.f32.mxu0 0.0
  %604 = vmatmul.mubr.f32.gmra.mrb[0].mxu0 %v421
  %v605 = vpop.f32.mrb[0].mxu0
  %v606 = vadd.f32 %v336, %v605
  %v607 = vpop.f32.mrb[0].mxu0
  %608 = vmatprep.mubr.f32.mxu0 0.0
  %609 = vmatmul.mubr.f32.gmra.mrb[0].mxu0 %v424
  %v610 = vpop.f32.mrb[0].mxu0
  %v611 = vadd.f32 %v341, %v610
  %v612 = vpop.f32.mrb[0].mxu0
  %613 = vmatprep.mubr.f32.mxu0 0.0
  %614 = vmatmul.mubr.f32.gmra.mrb[0].mxu0 %v427
  %v615 = vpop.f32.mrb[0].mxu0
  %v616 = vadd.f32 %v346, %v615
  %v617 = vpop.f32.mrb[0].mxu0
  %618 = vmatprep.mubr.f32.mxu0 0.0
  %619 = vmatmul.mubr.f32.gmra.mrb[0].mxu0 %v430
  %v620 = vpop.f32.mrb[0].mxu0
  %v621 = vadd.f32 %v351, %v620
  %v622 = vpop.f32.mrb[0].mxu0
  %623 = vmatprep.mubr.f32.mxu0 0.0
  %624 = vmatmul.mubr.f32.gmra.mrb[0].mxu0 %v433
  %v625 = vpop.f32.mrb[0].mxu0
  %v626 = vadd.f32 %v356, %v625
  %v627 = vpop.f32.mrb[0].mxu0
  %628 = vdwg.mxu0
  %v629 = vld [vmem:[%s5] sm:$0x1]
  %v631 = vlaneseq
  %v632 = vshrl.u32 %v631, 7
  %v633 = vsub.s32 0, %v632
  %v634 = vrot.slane %v629, %v633
  %v636 = vadd.f32 %v506, %v634
  %v637 = vadd.f32 %v511, %v634
  %v638 = vadd.f32 %v516, %v634
  %v639 = vadd.f32 %v521, %v634
  %v640 = vadd.f32 %v526, %v634
  %v641 = vadd.f32 %v531, %v634
  %v642 = vadd.f32 %v536, %v634
  %v643 = vadd.f32 %v541, %v634
  %v644 = vadd.f32 %v546, %v634
  %v645 = vadd.f32 %v551, %v634
  %v646 = vadd.f32 %v556, %v634
  %v647 = vadd.f32 %v561, %v634
  %v648 = vadd.f32 %v566, %v634
  %v649 = vadd.f32 %v571, %v634
  %v650 = vadd.f32 %v576, %v634
  %v651 = vadd.f32 %v581, %v634
  %v652 = vadd.f32 %v586, %v634
  %v653 = vadd.f32 %v591, %v634
  %v654 = vadd.f32 %v596, %v634
  %v655 = vadd.f32 %v601, %v634
  %v656 = vadd.f32 %v606, %v634
  %v657 = vadd.f32 %v611, %v634
  %v658 = vadd.f32 %v616, %v634
  %v659 = vadd.f32 %v621, %v634
  %v660 = vadd.f32 %v626, %v634
  %v661 = vmax.f32 %v636, 0.0
  %v662 = vmax.f32 %v637, 0.0
  %v663 = vmax.f32 %v638, 0.0
  %v664 = vmax.f32 %v639, 0.0
  %v665 = vmax.f32 %v640, 0.0
  %v666 = vmax.f32 %v641, 0.0
  %v667 = vmax.f32 %v642, 0.0
  %v668 = vmax.f32 %v643, 0.0
  %v669 = vmax.f32 %v644, 0.0
  %v670 = vmax.f32 %v645, 0.0
  %v671 = vmax.f32 %v646, 0.0
  %v672 = vmax.f32 %v647, 0.0
  %v673 = vmax.f32 %v648, 0.0
  %v674 = vmax.f32 %v649, 0.0
  %v675 = vmax.f32 %v650, 0.0
  %v676 = vmax.f32 %v651, 0.0
  %v677 = vmax.f32 %v652, 0.0
  %v678 = vmax.f32 %v653, 0.0
  %v679 = vmax.f32 %v654, 0.0
  %v680 = vmax.f32 %v655, 0.0
  %v681 = vmax.f32 %v656, 0.0
  %v682 = vmax.f32 %v657, 0.0
  %v683 = vmax.f32 %v658, 0.0
  %v684 = vmax.f32 %v659, 0.0
  %v685 = vmax.f32 %v660, 0.0
  %v686 = vld [vmem:[%s2] sm:$0xff]
  %v687 = vld [vmem:[%s2 + $0x8] sm:$0xff]
  %vm688 = vcmask 588800
  %v690 = vsel %vm688, %v687, 0
  %692 = vmatprep.subr.mxu0 0.0
  %693 = vmatpush1.msra.mxu0 %v661
  %694 = vmatprep.subr.mxu0 0.0
  %695 = vmatpush1.msra.mxu0 %v662
  %696 = vmatprep.subr.mxu0 0.0
  %697 = vmatpush1.msra.mxu0 %v663
  %698 = vmatprep.subr.mxu0 0.0
  %699 = vmatpush1.msra.mxu0 %v664
  %700 = vmatprep.subr.mxu0 0.0
  %701 = vmatpush1.msra.mxu0 %v665
  %702 = vmatprep.subr.mxu0 0.0
  %703 = vmatpush1.msra.mxu0 %v666
  %704 = vmatprep.subr.mxu0 0.0
  %705 = vmatpush1.msra.mxu0 %v667
  %706 = vmatprep.subr.mxu0 0.0
  %707 = vmatpush1.msra.mxu0 %v668
  %708 = vmatprep.subr.mxu0 0.0
  %709 = vmatpush1.msra.mxu0 %v669
  %710 = vmatprep.subr.mxu0 0.0
  %711 = vmatpush1.msra.mxu0 %v670
  %712 = vmatprep.subr.mxu0 0.0
  %713 = vmatpush1.msra.mxu0 %v671
  %714 = vmatprep.subr.mxu0 0.0
  %715 = vmatpush1.msra.mxu0 %v672
  %716 = vmatprep.subr.mxu0 0.0
  %717 = vmatpush1.msra.mxu0 %v673
  %718 = vmatprep.subr.mxu0 0.0
  %719 = vmatpush1.msra.mxu0 %v674
  %720 = vmatprep.subr.mxu0 0.0
  %721 = vmatpush1.msra.mxu0 %v675
  %722 = vmatprep.subr.mxu0 0.0
  %723 = vmatpush1.msra.mxu0 %v676
  %724 = vmatprep.subr.mxu0 0.0
  %725 = vmatpush1.msra.mxu0 %v677
  %726 = vmatprep.subr.mxu0 0.0
  %727 = vmatpush1.msra.mxu0 %v678
  %728 = vmatprep.subr.mxu0 0.0
  %729 = vmatpush1.msra.mxu0 %v679
  %730 = vmatprep.subr.mxu0 0.0
  %731 = vmatpush1.msra.mxu0 %v680
  %732 = vmatprep.subr.mxu0 0.0
  %733 = vmatpush1.msra.mxu0 %v681
  %734 = vmatprep.subr.mxu0 0.0
  %735 = vmatpush1.msra.mxu0 %v682
  %736 = vmatprep.subr.mxu0 0.0
  %737 = vmatpush1.msra.mxu0 %v683
  %738 = vmatprep.subr.mxu0 0.0
  %739 = vmatpush1.msra.mxu0 %v684
  %740 = vmatprep.subr.mxu0 0.0
  %741 = vmatpush1.msra.mxu0 %v685
  %742 = vmatprep.subr.mxu0 0.0
  %743 = vmatpush1.msra.mxu0 0.0
  %744 = vmatprep.subr.mxu0 0.0
  %745 = vmatpush1.msra.mxu0 0.0
  %746 = vmatprep.subr.mxu0 0.0
  %747 = vmatpush1.msra.mxu0 0.0
  %748 = vmatprep.subr.mxu0 0.0
  %749 = vmatpush1.msra.mxu0 0.0
  %750 = vmatprep.subr.mxu0 0.0
  %751 = vmatpush1.msra.mxu0 0.0
  %752 = vmatprep.subr.mxu0 0.0
  %753 = vmatpush1.msra.mxu0 0.0
  %754 = vmatprep.subr.mxu0 0.0
  %755 = vmatpush1.msra.mxu0 0.0
  %756 = vmatprep.mubr.f32.mxu0 %v690
  %757 = vmatmul.mubr.f32.gmra.mrb[0].mxu0 %v686
  %v758 = vpop.f32.mrb[0].mxu0
  %v759 = vadd.f32 0.0, %v758
  %v760 = vpop.f32.mrb[0].mxu0
  %761 = vdwg.mxu0
  %v762 = vld [vmem:[%s6] sm:$0xff]
  %v763 = vld [vmem:[%s6 + $0x8] sm:$0xff]
  %v764 = vld [vmem:[%s6 + $0x10] sm:$0xff]
  %v765 = vld [vmem:[%s6 + $0x18] sm:$0xff]
  %v766 = vld [vmem:[%s6 + $0x20] sm:$0xff]
  %v767 = vld [vmem:[%s6 + $0x28] sm:$0xff]
  %v768 = vld [vmem:[%s6 + $0x30] sm:$0xff]
  %v769 = vld [vmem:[%s6 + $0x38] sm:$0xff]
  %v770 = vld [vmem:[%s7] sm:$0x1]
  %v772 = vlaneseq
  %v773 = vshrl.u32 %v772, 7
  %v774 = vsub.s32 0, %v773
  %v775 = vrot.slane %v770, %v774
  %vm777 = vcmask 523264
  %v779 = vsel %vm777, %v759, 0
  %781 = vmatprep.subr.mxu0 0.0
  %782 = vmatpush1.msra.mxu0 %v762
  %783 = vmatprep.subr.mxu0 0.0
  %784 = vmatpush1.msra.mxu0 %v763
  %785 = vmatprep.subr.mxu0 0.0
  %786 = vmatpush1.msra.mxu0 %v764
  %787 = vmatprep.subr.mxu0 0.0
  %788 = vmatpush1.msra.mxu0 %v765
  %789 = vmatprep.subr.mxu0 0.0
  %790 = vmatpush1.msra.mxu0 %v766
  %791 = vmatprep.subr.mxu0 0.0
  %792 = vmatpush1.msra.mxu0 %v767
  %793 = vmatprep.subr.mxu0 0.0
  %794 = vmatpush1.msra.mxu0 %v768
  %795 = vmatprep.subr.mxu0 0.0
  %796 = vmatpush1.msra.mxu0 %v769
  %797 = vmatprep.subr.mxu0 0.0
  %798 = vmatpush1.msra.mxu0 0.0
  %799 = vmatprep.subr.mxu0 0.0
  %800 = vmatpush1.msra.mxu0 0.0
  %801 = vmatprep.subr.mxu0 0.0
  %802 = vmatpush1.msra.mxu0 0.0
  %803 = vmatprep.subr.mxu0 0.0
  %804 = vmatpush1.msra.mxu0 0.0
  %805 = vmatprep.subr.mxu0 0.0
  %806 = vmatpush1.msra.mxu0 0.0
  %807 = vmatprep.subr.mxu0 0.0
  %808 = vmatpush1.msra.mxu0 0.0
  %809 = vmatprep.subr.mxu0 0.0
  %810 = vmatpush1.msra.mxu0 0.0
  %811 = vmatprep.subr.mxu0 0.0
  %812 = vmatpush1.msra.mxu0 0.0
  %813 = vmatprep.subr.mxu0 0.0
  %814 = vmatpush1.msra.mxu0 0.0
  %815 = vmatprep.subr.mxu0 0.0
  %816 = vmatpush1.msra.mxu0 0.0
  %817 = vmatprep.subr.mxu0 0.0
  %818 = vmatpush1.msra.mxu0 0.0
  %819 = vmatprep.subr.mxu0 0.0
  %820 = vmatpush1.msra.mxu0 0.0
  %821 = vmatprep.subr.mxu0 0.0
  %822 = vmatpush1.msra.mxu0 0.0
  %823 = vmatprep.subr.mxu0 0.0
  %824 = vmatpush1.msra.mxu0 0.0
  %825 = vmatprep.subr.mxu0 0.0
  %826 = vmatpush1.msra.mxu0 0.0
  %827 = vmatprep.subr.mxu0 0.0
  %828 = vmatpush1.msra.mxu0 0.0
  %829 = vmatprep.subr.mxu0 0.0
  %830 = vmatpush1.msra.mxu0 0.0
  %831 = vmatprep.subr.mxu0 0.0
  %832 = vmatpush1.msra.mxu0 0.0
  %833 = vmatprep.subr.mxu0 0.0
  %834 = vmatpush1.msra.mxu0 0.0
  %835 = vmatprep.subr.mxu0 0.0
  %836 = vmatpush1.msra.mxu0 0.0
  %837 = vmatprep.subr.mxu0 0.0
  %838 = vmatpush1.msra.mxu0 0.0
  %839 = vmatprep.subr.mxu0 0.0
  %840 = vmatpush1.msra.mxu0 0.0
  %841 = vmatprep.subr.mxu0 0.0
  %842 = vmatpush1.msra.mxu0 0.0
  %843 = vmatprep.subr.mxu0 0.0
  %844 = vmatpush1.msra.mxu0 0.0
  %845 = vmatprep.mubr.f32.mxu0 0.0
  %846 = vmatmul.mubr.f32.gmra.mrb[0].mxu0 %v779
  %v847 = vpop.f32.mrb[0].mxu0
  %v848 = vadd.f32 %v775, %v847
  %v849 = vpop.f32.mrb[0].mxu0
  %850 = vdwg.mxu0
  %v851 = vmax.f32 %v848, 0.0
  %v852 = vld [vmem:[%s8] sm:$0x1]
  %v854 = vlaneseq
  %v855 = vshrl.u32 %v854, 7
  %v856 = vsub.s32 0, %v855
  %v857 = vrot.slane %v852, %v856
  %v859 = vmul.f32 %v851, %v857
  %vm860 = vcmask 261120
  %v861 = vsel %vm860, %v859, 0.0
  %862 = vadd.xlane.f32.xlu0 %v861
  %v863 = vpop.xlane.xlu0 %862
  %v864 = vld [vmem:[#allocation2] sm:$0x1]
  %v866 = vlaneseq
  %v867 = vshrl.u32 %v866, 7
  %v868 = vsub.s32 0, %v867
  %v869 = vrot.slane %v864, %v868
  %v871 = vadd.f32 %v863, %v869
  %v872 = vxor.u32 %v871, 2147483648
  %v873 = vmul.f32 %v872, 1.442695
  %v874 = vpow.pop %v873
  %v875 = vadd.f32 %v874, 1.0
  %v876 = vrcp.pop %v875
  %v877 = vmul.f32 1.0, %v876
  %vm878 = vcmask 7168
  %879 = vst.msk [vmem:[%s10] sm:$0xff] %vm878, %v877
  // Predicated region
  $region42: #{tpu_custom_call.1} parent=0 // pred_check
    _
  $region43: #{tpu_custom_call.1} parent=0 // pred_check_branch
    %881 = sbr.rel (0) target = $region45
  $region44: #{tpu_custom_call.1} parent=0 // pred_region
    _
  $region45: #{tpu_custom_call.1} parent=0 // pred_fallthru
    _
  // Predicated region
  $region46: #{tpu_custom_call.1} parent=0 // pred_check
    _
  $region47: #{tpu_custom_call.1} parent=0 // pred_check_branch
    %883 = sbr.rel (0) target = $region49
  $region48: #{tpu_custom_call.1} parent=0 // pred_region
    _
  $region49: #{tpu_custom_call.1} parent=0 // pred_fallthru
    _

</llo_original>
